<compile_context>
chip_gen: v7x
topology: tpu7x:2x2x1
jax: 0.10.0
libtpu: 0.0.40
codegen_flags: <defaults>
</compile_context>

<pallas_src>
import functools

import jax
import jax.numpy as jnp
from jax.experimental import pallas as pl
from jax.experimental.pallas import tpu as pltpu


_MIB = 1024 * 1024

# Subset of HF's ACT2FN that has a clean in-kernel equivalent.
_ACT2FN = {
    "silu": jax.nn.silu,
    "swish": jax.nn.silu,
    "gelu": jax.nn.gelu,
    "gelu_new": functools.partial(jax.nn.gelu, approximate=True),
    "relu": lambda v: jnp.maximum(v, 0.0),
}


def _round_up(v, m):
    return ((v + m - 1) // m) * m


def _vmem_budget_bytes():
    """Usable per-core VMEM: physical capacity minus headroom for Mosaic scratch."""
    try:
        cap = int(pltpu.get_tpu_info().vmem_capacity_bytes)
    except Exception:  # conservative fallback = v7x's 64 MiB per TensorCore
        cap = 64 * _MIB
    return max(cap - 16 * _MIB, 32 * _MIB)


# ---------------------------------------------------------------------------
# Kernels.  Weights arrive pre-transposed to (K, N) layout, so every matmul is
# a native (M,K)x(K,N) MXU op.
# ---------------------------------------------------------------------------

def _resident_kernel(x_ref, wgu_ref, wd_ref, o_ref, *, act, inter):
    """Weights fully VMEM-resident: full reduction in one step, no accumulator.

    wgu_ref: (hidden, 2*inter) = [gate^T | up^T] fused -> one MXU launch.
    """
    x = x_ref[...]
    gu = jnp.dot(x, wgu_ref[...], preferred_element_type=jnp.float32)
    g = gu[:, :inter]
    u = gu[:, inter:]
    h = (act(g) * u).astype(wd_ref.dtype)
    o_ref[...] = jnp.dot(h, wd_ref[...],
                         preferred_element_type=jnp.float32).astype(o_ref.dtype)


def _tiled_kernel(x_ref, wg_ref, wu_ref, wd_ref, o_ref, acc_ref, *, act):
    """Reduction over the intermediate axis tiled along grid axis 1 (arbitrary)."""
    j = pl.program_id(1)

    @pl.when(j == 0)
    def _():
        acc_ref[...] = jnp.zeros_like(acc_ref)

    x = x_ref[...]
    g = jnp.dot(x, wg_ref[...], preferred_element_type=jnp.float32)
    u = jnp.dot(x, wu_ref[...], preferred_element_type=jnp.float32)
    h = (act(g) * u).astype(wd_ref.dtype)
    acc_ref[...] += jnp.dot(h, wd_ref[...], preferred_element_type=jnp.float32)

    @pl.when(j == pl.num_programs(1) - 1)
    def _():
        o_ref[...] = acc_ref[...].astype(o_ref.dtype)


# ---------------------------------------------------------------------------
# Wrapper.
# ---------------------------------------------------------------------------

def kg_adapter_mlp(x, gate_w, up_w, down_w, *, hidden_act="silu",
                   compute_dtype=jnp.bfloat16, block_m=512, block_i=512,
                   force_tiled=False):
    """Forward of KgAdapterMLP: down_proj(act(gate_proj(x)) * up_proj(x)).

    x: (..., hidden)
    Weights in PyTorch nn.Linear layout:
      gate_w, up_w: (intermediate, hidden)   down_w: (hidden, intermediate)

    compute_dtype: dtype for x/weights fed to the MXU (default bf16; all dots
      still accumulate in f32).  Pass None to keep the input dtype exactly.
    block_m / block_i: per-chip tunables (sweep on v5e/v6e/v7x); they are
      shrunk automatically to fit the chip's VMEM budget.
    """
    act = _ACT2FN[hidden_act]
    orig_shape = x.shape
    out_dtype = x.dtype
    hidden = orig_shape[-1]
    inter = gate_w.shape[0]
    assert gate_w.shape == (inter, hidden)
    assert up_w.shape == (inter, hidden)
    assert down_w.shape == (hidden, inter)

    rows = 1
    for d in orig_shape[:-1]:
        rows *= d

    cdt = jnp.dtype(compute_dtype) if compute_dtype is not None else jnp.dtype(out_dtype)
    itemsize = cdt.itemsize
    out_itemsize = jnp.dtype(out_dtype).itemsize
    granule = 8 if itemsize >= 4 else (16 if itemsize == 2 else 32)

    x2 = x.reshape(rows, hidden).astype(cdt)
    # Pre-transpose once to (K, N): gate/up -> (hidden, inter), down -> (inter, hidden).
    # (A one-time HBM-side cost; folded by XLA when weights are constants.)
    gate_t = gate_w.astype(cdt).T
    up_t = up_w.astype(cdt).T
    down_t = down_w.astype(cdt).T

    budget = _vmem_budget_bytes()

    # Row tile: partial last block is handled by Pallas masked writes (rows are
    # independent).  If everything lands in one row block, split it in two so
    # both TensorCores (v7x megacore) get work on the "parallel" axis.
    bm = min(block_m, _round_up(rows, granule))
    if rows > granule and -(-rows // bm) < 2:
        bm = _round_up(-(-rows // 2), granule)

    def _xo_bytes(bm_):
        # double-buffered x tile + double-buffered out tile
        return 2 * bm_ * hidden * itemsize + 2 * bm_ * hidden * out_itemsize

    # ---------------- weights-resident fast path ----------------
    # All three weights fit in VMEM (counted with 2 pipeline buffers each, the
    # conservative allocation): drop the reduction grid axis, DMA the weights
    # once (index_map is constant), no accumulator scratch, single fused
    # gate|up dot per row tile.
    w_resident_bytes = 2 * (3 * hidden * inter) * itemsize
    if not force_tiled:
        bm_r = bm
        while bm_r > granule and w_resident_bytes + _xo_bytes(bm_r) > budget:
            bm_r = max(granule, _round_up(bm_r // 2, granule))
        if w_resident_bytes + _xo_bytes(bm_r) <= budget:
            wgu_t = jnp.concatenate([gate_t, up_t], axis=1)  # (hidden, 2*inter)
            out = pl.pallas_call(
                functools.partial(_resident_kernel, act=act, inter=inter),
                out_shape=jax.ShapeDtypeStruct((rows, hidden), out_dtype),
                grid_spec=pltpu.PrefetchScalarGridSpec(
                    num_scalar_prefetch=0,
                    grid=(pl.cdiv(rows, bm_r),),
                    in_specs=[
                        pl.BlockSpec((bm_r, hidden), lambda i: (i, 0)),       # x
                        pl.BlockSpec((hidden, 2 * inter), lambda i: (0, 0)),  # [gate|up]^T
                        pl.BlockSpec((inter, hidden), lambda i: (0, 0)),      # down^T
                    ],
                    out_specs=pl.BlockSpec((bm_r, hidden), lambda i: (i, 0)),
                ),
                compiler_params=pltpu.CompilerParams(
                    dimension_semantics=("parallel",),
                    vmem_limit_bytes=int(budget),
                ),
            )(x2, wgu_t, down_t)
            return out.reshape(orig_shape)

    # ---------------- tiled reduction path ----------------
    bi = _round_up(min(block_i, _round_up(inter, 128)), 128)

    def _tiled_bytes(bm_, bi_):
        w = 2 * (3 * hidden * bi_) * itemsize            # 3 weight tiles, double-buffered
        return w + _xo_bytes(bm_) + bm_ * hidden * 4     # + f32 accumulator

    while bi > 128 and _tiled_bytes(bm, bi) > budget:
        bi -= 128
    while bm > granule and _tiled_bytes(bm, bi) > budget:
        bm = max(granule, _round_up(bm // 2, granule))

    # Zero-pad the intermediate axis to a multiple of bi.  Exact: padded up_proj
    # columns are zero, so padded h columns are zero and the padded down_proj
    # rows contribute nothing.
    inter_p = _round_up(inter, bi)
    if inter_p != inter:
        pad = inter_p - inter
        gate_t = jnp.pad(gate_t, ((0, 0), (0, pad)))
        up_t = jnp.pad(up_t, ((0, 0), (0, pad)))
        down_t = jnp.pad(down_t, ((0, pad), (0, 0)))

    grid = (pl.cdiv(rows, bm), inter_p // bi)

    out = pl.pallas_call(
        functools.partial(_tiled_kernel, act=act),
        out_shape=jax.ShapeDtypeStruct((rows, hidden), out_dtype),
        grid_spec=pltpu.PrefetchScalarGridSpec(
            num_scalar_prefetch=0,
            grid=grid,
            in_specs=[
                pl.BlockSpec((bm, hidden), lambda i, j: (i, 0)),   # x (resident over j)
                pl.BlockSpec((hidden, bi), lambda i, j: (0, j)),   # gate_proj.weight^T
                pl.BlockSpec((hidden, bi), lambda i, j: (0, j)),   # up_proj.weight^T
                pl.BlockSpec((bi, hidden), lambda i, j: (j, 0)),   # down_proj.weight^T
            ],
            out_specs=pl.BlockSpec((bm, hidden), lambda i, j: (i, 0)),
            scratch_shapes=[pltpu.VMEM((bm, hidden), jnp.float32)],
        ),
        compiler_params=pltpu.CompilerParams(
            dimension_semantics=("parallel", "arbitrary"),
            vmem_limit_bytes=int(budget),
        ),
    )(x2, gate_t, up_t, down_t)

    return out.reshape(orig_shape)


def _reference(x, gate_w, up_w, down_w, hidden_act="silu"):
    act = _ACT2FN[hidden_act]
    g = jnp.einsum("...h,ih->...i", x, gate_w)
    u = jnp.einsum("...h,ih->...i", x, up_w)
    return jnp.einsum("...i,hi->...h", act(g) * u, down_w)


if __name__ == "__main__":
    key = jax.random.PRNGKey(0)
    batch, seq, hidden, intermediate = 2, 8, 32, 256
    kx, kg, ku, kd = jax.random.split(key, 4)

    scale = 0.1
    x = jax.random.normal(kx, (batch, seq, hidden), dtype=jnp.float32)
    gate_w = scale * jax.random.normal(kg, (intermediate, hidden), dtype=jnp.float32)
    up_w = scale * jax.random.normal(ku, (intermediate, hidden), dtype=jnp.float32)
    down_w = scale * jax.random.normal(kd, (hidden, intermediate), dtype=jnp.float32)

    ref = _reference(x, gate_w, up_w, down_w, hidden_act="silu")

    # 1) Default path: bf16 compute, weights-resident (adapter-sized intermediate).
    out = jax.block_until_ready(kg_adapter_mlp(x, gate_w, up_w, down_w, hidden_act="silu"))
    assert out.shape == ref.shape, (out.shape, ref.shape)
    assert out.dtype == ref.dtype, (out.dtype, ref.dtype)
    err = float(jnp.max(jnp.abs(out - ref)))
    assert jnp.allclose(out, ref, atol=5e-2, rtol=5e-2), f"resident path mismatch, max_err={err}"

    # 2) Tiled-reduction path in f32 (exercises the accumulator over the j axis).
    out2 = jax.block_until_ready(
        kg_adapter_mlp(x, gate_w, up_w, down_w, hidden_act="silu",
                       compute_dtype=None, force_tiled=True, block_m=8, block_i=128))
    assert out2.shape == ref.shape and out2.dtype == ref.dtype
    err2 = float(jnp.max(jnp.abs(out2 - ref)))
    assert jnp.allclose(out2, ref, atol=2e-2, rtol=2e-2), f"tiled path mismatch, max_err={err2}"

    print("KERNEL_OK")
</pallas_src>

<mosaic_0001>
module attributes {stable_mosaic.version = 11 : i64} {
  func.func @_resident_kernel(%arg0: i32, %arg1: memref<16x32xbf16, #tpu.memory_space<vmem>>, %arg2: memref<32x512xbf16, #tpu.memory_space<vmem>>, %arg3: memref<256x32xbf16, #tpu.memory_space<vmem>>, %arg4: memref<16x32xf32, #tpu.memory_space<vmem>>) attributes {dimension_semantics = [#tpu.dimension_semantics<parallel>], iteration_bounds = array<i64: 1>, scalar_prefetch = 0 : i64, scratch_operands = 0 : i64, tpu.core_type = #tpu.core_type<tc>, window_params = [{transform_indices = @transform_0, window_bounds = array<i64: 16, 32>}, {pipeline_mode = #tpu.pipeline_mode<synchronous>, transform_indices = @transform_1, window_bounds = array<i64: 32, 512>}, {pipeline_mode = #tpu.pipeline_mode<synchronous>, transform_indices = @transform_2, window_bounds = array<i64: 256, 32>}, {transform_indices = @transform_3, window_bounds = array<i64: 16, 32>}]} {
    %c0 = arith.constant 0 : index
    %c0_0 = arith.constant 0 : index
    %0 = vector.load %arg1[%c0, %c0_0] : memref<16x32xbf16, #tpu.memory_space<vmem>>, vector<16x32xbf16>
    %c0_1 = arith.constant 0 : index
    %c0_2 = arith.constant 0 : index
    %1 = vector.load %arg2[%c0_1, %c0_2] : memref<32x512xbf16, #tpu.memory_space<vmem>>, vector<32x512xbf16>
    %cst = arith.constant dense<0.000000e+00> : vector<16x512xf32>
    %2 = tpu.matmul %0, %1, %cst {dimension_numbers = #tpu.dot_dimension_numbers<[1], [0], [0], [1], [0, 0, 1, 1], [], []>} : vector<16x32xbf16>, vector<32x512xbf16>, vector<16x512xf32> -> vector<16x512xf32>
    %3 = vector.extract_strided_slice %2 {offsets = [0, 0], sizes = [16, 256], strides = [1, 1]} : vector<16x512xf32> to vector<16x256xf32>
    %4 = vector.extract_strided_slice %2 {offsets = [0, 256], sizes = [16, 256], strides = [1, 1]} : vector<16x512xf32> to vector<16x256xf32>
    %5 = arith.negf %3 : vector<16x256xf32>
    %6 = math.exp %5 : vector<16x256xf32>
    %cst_3 = arith.constant 1.000000e+00 : f32
    %7 = vector.broadcast %cst_3 : f32 to vector<16x256xf32>
    %8 = arith.addf %7, %6 : vector<16x256xf32>
    %9 = arith.divf %7, %8 : vector<16x256xf32>
    %10 = arith.mulf %3, %9 : vector<16x256xf32>
    %11 = arith.mulf %10, %4 : vector<16x256xf32>
    %12 = arith.truncf %11 : vector<16x256xf32> to vector<16x256xbf16>
    %c0_4 = arith.constant 0 : index
    %c0_5 = arith.constant 0 : index
    %13 = vector.load %arg3[%c0_4, %c0_5] : memref<256x32xbf16, #tpu.memory_space<vmem>>, vector<256x32xbf16>
    %cst_6 = arith.constant dense<0.000000e+00> : vector<16x32xf32>
    %14 = tpu.matmul %12, %13, %cst_6 {dimension_numbers = #tpu.dot_dimension_numbers<[1], [0], [0], [1], [0, 0, 1, 1], [], []>} : vector<16x256xbf16>, vector<256x32xbf16>, vector<16x32xf32> -> vector<16x32xf32>
    %c0_7 = arith.constant 0 : index
    %c0_8 = arith.constant 0 : index
    %15 = vector.load %arg4[%c0_7, %c0_8] : memref<16x32xf32, #tpu.memory_space<vmem>>, vector<16x32xf32>
    tpu.vector_store %arg4[%c0_7, %c0_8], %14 {strides = array<i32>} : memref<16x32xf32, #tpu.memory_space<vmem>>, vector<16x32xf32>,
    return
  }
  func.func @transform_0(%arg0: i32) -> (i32, i32) {
    %c0_i32 = arith.constant 0 : i32
    %c0_i32_0 = arith.constant 0 : i32
    return %arg0, %c0_i32 : i32, i32
  }
  func.func @transform_1(%arg0: i32) -> (i32, i32) {
    %c0_i32 = arith.constant 0 : i32
    %c0_i32_0 = arith.constant 0 : i32
    %c0_i32_1 = arith.constant 0 : i32
    return %c0_i32, %c0_i32_0 : i32, i32
  }
  func.func @transform_2(%arg0: i32) -> (i32, i32) {
    %c0_i32 = arith.constant 0 : i32
    %c0_i32_0 = arith.constant 0 : i32
    %c0_i32_1 = arith.constant 0 : i32
    return %c0_i32, %c0_i32_0 : i32, i32
  }
  func.func @transform_3(%arg0: i32) -> (i32, i32) {
    %c0_i32 = arith.constant 0 : i32
    %c0_i32_0 = arith.constant 0 : i32
    return %arg0, %c0_i32 : i32, i32
  }
}

</mosaic_0001>

<llo_original>
// kernel: tpu_custom_call.1
$region0: #{tpu_custom_call.1}
  #allocation0 [shape = 'u32[]', space=smem, size = 0x4, offset = 0x4, fixed_abs, tag = 'smem constant byte address 0x4 - core index']
  #allocation1 [shape = 'u32[144,128]{1,0:T(1,128)}', space=vmem, size = 0x12000, scoped, tag = 'internal scratch']
  %s0 = inlined_call_operand.vmem [shape: bf16[16,32], index: 0, kind: input, shape index: {}]
  %s1 = inlined_call_operand.vmem [shape: bf16[32,512], index: 1, kind: input, shape index: {}]
  %s2 = inlined_call_operand.vmem [shape: bf16[256,32], index: 2, kind: input, shape index: {}]
  %s3 = inlined_call_operand.hbm [shape: f32[16,32], index: 3, kind: output, shape index: {}]
  %s4 = sld [smem:[#allocation0]]
  $region22: #{tpu_custom_call.1} parent=0
    _
  %s6 = ssub.s32 1, %s4
  %s7 = scalar_select 0, %s6, %s4
  $region1: #{tpu_custom_call.1} parent=0
    #allocation2 [shape = 'u8[8192]{0}', space=vmem, size = 0x2000, scoped, tag = 'output window, operand 0, single buffered']
    #allocation3 [shape = 's32[1]{0}', space=sflag, size = 0x4, scoped, tag = 'scoped memory for tpu_custom_call.1']
    %8 = vsyncpa [#allocation3], 0
    // Predicated region
    $region2: #{tpu_custom_call.1} parent=1 // pred_check
      _
    $region3: #{tpu_custom_call.1} parent=1 // pred_check_branch
      %10 = sbr.rel (0) target = $region5
    $region4: #{tpu_custom_call.1} parent=1 // pred_region
      _
    $region5: #{tpu_custom_call.1} parent=1 // pred_fallthru
      _
    // Predicated region
    $region6: #{tpu_custom_call.1} parent=1 // pred_check
      _
    $region7: #{tpu_custom_call.1} parent=1 // pred_check_branch
      %12 = sbr.rel (0) target = $region9
    $region8: #{tpu_custom_call.1} parent=1 // pred_region
      _
    $region9: #{tpu_custom_call.1} parent=1 // pred_fallthru
      _
    // Predicated region
    $region10: #{tpu_custom_call.1} parent=1 // pred_check
      _
    $region11: #{tpu_custom_call.1} parent=1 // pred_check_branch
      %14 = sbr.rel (0) target = $region13
    $region12: #{tpu_custom_call.1} parent=1 // pred_region
      _
    $region13: #{tpu_custom_call.1} parent=1 // pred_fallthru
      _
    %v16 = vld [vmem:[%s0] sm:$0xf]
    %v17 = vld [vmem:[%s0 + $0x4] sm:$0xf]
    %v18 = vld [vmem:[%s1] sm:$0xff]
    %v19 = vld [vmem:[%s1 + $0x8] sm:$0xff]
    %v20 = vld [vmem:[%s1 + $0x10] sm:$0xff]
    %v21 = vld [vmem:[%s1 + $0x18] sm:$0xff]
    %v22 = vld [vmem:[%s1 + $0x20] sm:$0xff]
    %v23 = vld [vmem:[%s1 + $0x28] sm:$0xff]
    %v24 = vld [vmem:[%s1 + $0x30] sm:$0xff]
    %v25 = vld [vmem:[%s1 + $0x38] sm:$0xff]
    %v28 = vunpack.c.l.b16 %v16
    %v29 = vunpack.c.l.b16 %v17
    %v30 = vpack.c.b16 %v29, %v28
    %v39 = vunpack.c.l.b16 %v18
    %v40 = vunpack.c.h.b16 %v18
    %v41 = vunpack.c.l.b16 %v19
    %v42 = vunpack.c.h.b16 %v19
    %v43 = vunpack.c.l.b16 %v20
    %v44 = vunpack.c.h.b16 %v20
    %v45 = vunpack.c.l.b16 %v21
    %v46 = vunpack.c.h.b16 %v21
    %v47 = vunpack.c.l.b16 %v22
    %v48 = vunpack.c.h.b16 %v22
    %v49 = vunpack.c.l.b16 %v23
    %v50 = vunpack.c.h.b16 %v23
    %v51 = vunpack.c.l.b16 %v24
    %v52 = vunpack.c.h.b16 %v24
    %v53 = vunpack.c.l.b16 %v25
    %v54 = vunpack.c.h.b16 %v25
    %v55 = vpack.c.b16 %v43, %v39
    %v56 = vpack.c.b16 %v44, %v40
    %v57 = vpack.c.b16 %v45, %v41
    %v58 = vpack.c.b16 %v46, %v42
    %v59 = vpack.c.b16 %v51, %v47
    %v60 = vpack.c.b16 %v52, %v48
    %v61 = vpack.c.b16 %v53, %v49
    %v62 = vpack.c.b16 %v54, %v50
    %vm71 = vcmask 261120
    %v73 = vsel %vm71, %v30, 0
    %75 = vmatprep.subr.bf16.mxu0 %v56
    %76 = vmatpush1.bf16.msra.mxu0 %v55
    %77 = vmatprep.subr.bf16.mxu0 %v60
    %78 = vmatpush1.bf16.msra.mxu0 %v59
    %79 = vmatprep.subr.bf16.mxu0 0
    %80 = vmatpush1.bf16.msra.mxu0 0
    %81 = vmatprep.subr.bf16.mxu0 0
    %82 = vmatpush1.bf16.msra.mxu0 0
    %83 = vmatprep.subr.bf16.mxu0 0
    %84 = vmatpush1.bf16.msra.mxu0 0
    %85 = vmatprep.subr.bf16.mxu0 0
    %86 = vmatpush1.bf16.msra.mxu0 0
    %87 = vmatprep.subr.bf16.mxu0 0
    %88 = vmatpush1.bf16.msra.mxu0 0
    %89 = vmatprep.subr.bf16.mxu0 0
    %90 = vmatpush1.bf16.msra.mxu0 0
    %91 = vmatprep.subr.bf16.mxu0 0
    %92 = vmatpush1.bf16.msra.mxu0 0
    %93 = vmatprep.subr.bf16.mxu0 0
    %94 = vmatpush1.bf16.msra.mxu0 0
    %95 = vmatprep.subr.bf16.mxu0 0
    %96 = vmatpush1.bf16.msra.mxu0 0
    %97 = vmatprep.subr.bf16.mxu0 0
    %98 = vmatpush1.bf16.msra.mxu0 0
    %99 = vmatprep.subr.bf16.mxu0 0
    %100 = vmatpush1.bf16.msra.mxu0 0
    %101 = vmatprep.subr.bf16.mxu0 0
    %102 = vmatpush1.bf16.msra.mxu0 0
    %103 = vmatprep.subr.bf16.mxu0 0
    %104 = vmatpush1.bf16.msra.mxu0 0
    %105 = vmatprep.subr.bf16.mxu0 0
    %106 = vmatpush1.bf16.msra.mxu0 0
    %107 = vmatprep.mubr.bf16.mxu0 0
    %108 = vmatmul.mubr.bf16.gmra.mrb[0].mxu0 %v73
    %v109 = vpop.f32.mrb[0].mxu0
    %v110 = vadd.f32 0.0, %v109
    %v111 = vpop.f32.mrb[0].mxu0
    %v112 = vadd.f32 0.0, %v111
    %v113 = vpop.f32.mrb[0].mxu0
    %v114 = vadd.f32 0.0, %v113
    %v115 = vpop.f32.mrb[0].mxu0
    %v116 = vadd.f32 0.0, %v115
    %117 = vdwg.mxu0
    %118 = vmatprep.subr.bf16.mxu0 %v58
    %119 = vmatpush1.bf16.msra.mxu0 %v57
    %120 = vmatprep.subr.bf16.mxu0 %v62
    %121 = vmatpush1.bf16.msra.mxu0 %v61
    %122 = vmatprep.subr.bf16.mxu0 0
    %123 = vmatpush1.bf16.msra.mxu0 0
    %124 = vmatprep.subr.bf16.mxu0 0
    %125 = vmatpush1.bf16.msra.mxu0 0
    %126 = vmatprep.subr.bf16.mxu0 0
    %127 = vmatpush1.bf16.msra.mxu0 0
    %128 = vmatprep.subr.bf16.mxu0 0
    %129 = vmatpush1.bf16.msra.mxu0 0
    %130 = vmatprep.subr.bf16.mxu0 0
    %131 = vmatpush1.bf16.msra.mxu0 0
    %132 = vmatprep.subr.bf16.mxu0 0
    %133 = vmatpush1.bf16.msra.mxu0 0
    %134 = vmatprep.subr.bf16.mxu0 0
    %135 = vmatpush1.bf16.msra.mxu0 0
    %136 = vmatprep.subr.bf16.mxu0 0
    %137 = vmatpush1.bf16.msra.mxu0 0
    %138 = vmatprep.subr.bf16.mxu0 0
    %139 = vmatpush1.bf16.msra.mxu0 0
    %140 = vmatprep.subr.bf16.mxu0 0
    %141 = vmatpush1.bf16.msra.mxu0 0
    %142 = vmatprep.subr.bf16.mxu0 0
    %143 = vmatpush1.bf16.msra.mxu0 0
    %144 = vmatprep.subr.bf16.mxu0 0
    %145 = vmatpush1.bf16.msra.mxu0 0
    %146 = vmatprep.subr.bf16.mxu0 0
    %147 = vmatpush1.bf16.msra.mxu0 0
    %148 = vmatprep.subr.bf16.mxu0 0
    %149 = vmatpush1.bf16.msra.mxu0 0
    %150 = vmatprep.mubr.bf16.mxu0 0
    %151 = vmatmul.mubr.bf16.gmra.mrb[0].mxu0 %v73
    %v152 = vpop.f32.mrb[0].mxu0
    %v153 = vadd.f32 0.0, %v152
    %v154 = vpop.f32.mrb[0].mxu0
    %v155 = vadd.f32 0.0, %v154
    %v156 = vpop.f32.mrb[0].mxu0
    %v157 = vadd.f32 0.0, %v156
    %v158 = vpop.f32.mrb[0].mxu0
    %v159 = vadd.f32 0.0, %v158
    %160 = vdwg.mxu0
    %v161 = vxor.u32 %v110, 2147483648
    %v162 = vxor.u32 %v112, 2147483648
    %v163 = vxor.u32 %v114, 2147483648
    %v164 = vxor.u32 %v116, 2147483648
    %v165 = vmul.f32 %v161, 1.442695
    %v166 = vpow.pop %v165
    %v167 = vmul.f32 %v162, 1.442695
    %v168 = vpow.pop %v167
    %v169 = vmul.f32 %v163, 1.442695
    %v170 = vpow.pop %v169
    %v171 = vmul.f32 %v164, 1.442695
    %v172 = vpow.pop %v171
    %v173 = vadd.f32 %v166, 1.0
    %v174 = vadd.f32 %v168, 1.0
    %v175 = vadd.f32 %v170, 1.0
    %v176 = vadd.f32 %v172, 1.0
    %v177 = vrcp.pop %v173
    %v178 = vmul.f32 1.0, %v177
    %v179 = vrcp.pop %v174
    %v180 = vmul.f32 1.0, %v179
    %v181 = vrcp.pop %v175
    %v182 = vmul.f32 1.0, %v181
    %v183 = vrcp.pop %v176
    %v184 = vmul.f32 1.0, %v183
    %v185 = vmul.f32 %v110, %v178
    %v186 = vmul.f32 %v112, %v180
    %v187 = vmul.f32 %v114, %v182
    %v188 = vmul.f32 %v116, %v184
    %v189 = vmul.f32 %v185, %v153
    %v190 = vmul.f32 %v186, %v155
    %v191 = vmul.f32 %v187, %v157
    %v192 = vmul.f32 %v188, %v159
    %v193 = vpack.c.bf16 %v191, %v189
    %v194 = vpack.c.bf16 %v192, %v190
    %v195 = vld [vmem:[%s2] sm:$0xf]
    %v196 = vld [vmem:[%s2 + $0x4] sm:$0xf]
    %v197 = vld [vmem:[%s2 + $0x8] sm:$0xf]
    %v198 = vld [vmem:[%s2 + $0xc] sm:$0xf]
    %v199 = vld [vmem:[%s2 + $0x10] sm:$0xf]
    %v200 = vld [vmem:[%s2 + $0x14] sm:$0xf]
    %v201 = vld [vmem:[%s2 + $0x18] sm:$0xf]
    %v202 = vld [vmem:[%s2 + $0x1c] sm:$0xf]
    %v203 = vld [vmem:[%s2 + $0x20] sm:$0xf]
    %v204 = vld [vmem:[%s2 + $0x24] sm:$0xf]
    %v205 = vld [vmem:[%s2 + $0x28] sm:$0xf]
    %v206 = vld [vmem:[%s2 + $0x2c] sm:$0xf]
    %v207 = vld [vmem:[%s2 + $0x30] sm:$0xf]
    %v208 = vld [vmem:[%s2 + $0x34] sm:$0xf]
    %v209 = vld [vmem:[%s2 + $0x38] sm:$0xf]
    %v210 = vld [vmem:[%s2 + $0x3c] sm:$0xf]
    %v211 = vld [vmem:[%s2 + $0x40] sm:$0xf]
    %v212 = vld [vmem:[%s2 + $0x44] sm:$0xf]
    %v213 = vld [vmem:[%s2 + $0x48] sm:$0xf]
    %v214 = vld [vmem:[%s2 + $0x4c] sm:$0xf]
    %v215 = vld [vmem:[%s2 + $0x50] sm:$0xf]
    %v216 = vld [vmem:[%s2 + $0x54] sm:$0xf]
    %v217 = vld [vmem:[%s2 + $0x58] sm:$0xf]
    %v218 = vld [vmem:[%s2 + $0x5c] sm:$0xf]
    %v219 = vld [vmem:[%s2 + $0x60] sm:$0xf]
    %v220 = vld [vmem:[%s2 + $0x64] sm:$0xf]
    %v221 = vld [vmem:[%s2 + $0x68] sm:$0xf]
    %v222 = vld [vmem:[%s2 + $0x6c] sm:$0xf]
    %v223 = vld [vmem:[%s2 + $0x70] sm:$0xf]
    %v224 = vld [vmem:[%s2 + $0x74] sm:$0xf]
    %v225 = vld [vmem:[%s2 + $0x78] sm:$0xf]
    %v226 = vld [vmem:[%s2 + $0x7c] sm:$0xf]
    %v259 = vunpack.c.l.b16 %v195
    %v260 = vunpack.c.l.b16 %v196
    %v261 = vunpack.c.l.b16 %v197
    %v262 = vunpack.c.l.b16 %v198
    %v263 = vunpack.c.l.b16 %v199
    %v264 = vunpack.c.l.b16 %v200
    %v265 = vunpack.c.l.b16 %v201
    %v266 = vunpack.c.l.b16 %v202
    %v267 = vunpack.c.l.b16 %v203
    %v268 = vunpack.c.l.b16 %v204
    %v269 = vunpack.c.l.b16 %v205
    %v270 = vunpack.c.l.b16 %v206
    %v271 = vunpack.c.l.b16 %v207
    %v272 = vunpack.c.l.b16 %v208
    %v273 = vunpack.c.l.b16 %v209
    %v274 = vunpack.c.l.b16 %v210
    %v275 = vunpack.c.l.b16 %v211
    %v276 = vunpack.c.l.b16 %v212
    %v277 = vunpack.c.l.b16 %v213
    %v278 = vunpack.c.l.b16 %v214
    %v279 = vunpack.c.l.b16 %v215
    %v280 = vunpack.c.l.b16 %v216
    %v281 = vunpack.c.l.b16 %v217
    %v282 = vunpack.c.l.b16 %v218
    %v283 = vunpack.c.l.b16 %v219
    %v284 = vunpack.c.l.b16 %v220
    %v285 = vunpack.c.l.b16 %v221
    %v286 = vunpack.c.l.b16 %v222
    %v287 = vunpack.c.l.b16 %v223
    %v288 = vunpack.c.l.b16 %v224
    %v289 = vunpack.c.l.b16 %v225
    %v290 = vunpack.c.l.b16 %v226
    %v291 = vpack.c.b16 %v260, %v259
    %v292 = vpack.c.b16 %v262, %v261
    %v293 = vpack.c.b16 %v264, %v263
    %v294 = vpack.c.b16 %v266, %v265
    %v295 = vpack.c.b16 %v268, %v267
    %v296 = vpack.c.b16 %v270, %v269
    %v297 = vpack.c.b16 %v272, %v271
    %v298 = vpack.c.b16 %v274, %v273
    %v299 = vpack.c.b16 %v276, %v275
    %v300 = vpack.c.b16 %v278, %v277
    %v301 = vpack.c.b16 %v280, %v279
    %v302 = vpack.c.b16 %v282, %v281
    %v303 = vpack.c.b16 %v284, %v283
    %v304 = vpack.c.b16 %v286, %v285
    %v305 = vpack.c.b16 %v288, %v287
    %v306 = vpack.c.b16 %v290, %v289
    %323 = vmatprep.subr.bf16.mxu0 0
    %324 = vmatpush1.bf16.msra.mxu0 %v291
    %325 = vmatprep.subr.bf16.mxu0 0
    %326 = vmatpush1.bf16.msra.mxu0 %v292
    %327 = vmatprep.subr.bf16.mxu0 0
    %328 = vmatpush1.bf16.msra.mxu0 %v293
    %329 = vmatprep.subr.bf16.mxu0 0
    %330 = vmatpush1.bf16.msra.mxu0 %v294
    %331 = vmatprep.subr.bf16.mxu0 0
    %332 = vmatpush1.bf16.msra.mxu0 %v295
    %333 = vmatprep.subr.bf16.mxu0 0
    %334 = vmatpush1.bf16.msra.mxu0 %v296
    %335 = vmatprep.subr.bf16.mxu0 0
    %336 = vmatpush1.bf16.msra.mxu0 %v297
    %337 = vmatprep.subr.bf16.mxu0 0
    %338 = vmatpush1.bf16.msra.mxu0 %v298
    %339 = vmatprep.subr.bf16.mxu0 0
    %340 = vmatpush1.bf16.msra.mxu0 %v299
    %341 = vmatprep.subr.bf16.mxu0 0
    %342 = vmatpush1.bf16.msra.mxu0 %v300
    %343 = vmatprep.subr.bf16.mxu0 0
    %344 = vmatpush1.bf16.msra.mxu0 %v301
    %345 = vmatprep.subr.bf16.mxu0 0
    %346 = vmatpush1.bf16.msra.mxu0 %v302
    %347 = vmatprep.subr.bf16.mxu0 0
    %348 = vmatpush1.bf16.msra.mxu0 %v303
    %349 = vmatprep.subr.bf16.mxu0 0
    %350 = vmatpush1.bf16.msra.mxu0 %v304
    %351 = vmatprep.subr.bf16.mxu0 0
    %352 = vmatpush1.bf16.msra.mxu0 %v305
    %353 = vmatprep.subr.bf16.mxu0 0
    %354 = vmatpush1.bf16.msra.mxu0 %v306
    %355 = vmatprep.mubr.bf16.mxu0 %v194
    %356 = vmatmul.mubr.bf16.gmra.mrb[0].mxu0 %v193
    %v357 = vpop.f32.mrb[0].mxu0
    %v358 = vadd.f32 0.0, %v357
    %v359 = vpop.f32.mrb[0].mxu0
    %v360 = vpop.f32.mrb[0].mxu0
    %v361 = vadd.f32 0.0, %v360
    %v362 = vpop.f32.mrb[0].mxu0
    %363 = vdwg.mxu0
    %364 = vst.msk [vmem:[#allocation2] sm:$0xff] %vm71, %v358
    %365 = vst.msk [vmem:[#allocation2 + $0x8] sm:$0xff] %vm71, %v361
    // Predicated region
    $region14: #{tpu_custom_call.1} parent=1 // pred_check
      _
    $region15: #{tpu_custom_call.1} parent=1 // pred_check_branch
      %367 = sbr.rel (0) target = $region17
    $region16: #{tpu_custom_call.1} parent=1 // pred_region
      %s369 = ssub.s32 256, 256
      %370 = vsyncadd [#allocation3], %s369
      %s371 = sshll.u32 [#allocation2], 4
      %s372 = int_to_ptr.vmem [resolvable:$true] %s371
      %377 = dma.vmem_to_hbm [thread:$0]  %s372, 256, %s3, [#allocation3], 128, 128, 8
    $region17: #{tpu_custom_call.1} parent=1 // pred_fallthru
      _
    // Predicated region
    $region18: #{tpu_custom_call.1} parent=1 // pred_check
      _
    $region19: #{tpu_custom_call.1} parent=1 // pred_check_branch
      %379 = sbr.rel (0) target = $region21
    $region20: #{tpu_custom_call.1} parent=1 // pred_region
      %380 = dma.done [#allocation3], 256
    $region21: #{tpu_custom_call.1} parent=1 // pred_fallthru
      _
    %381 = vsyncpa [#allocation3], 1

</llo_original>
